<compile_context>
chip_gen: v5e
topology: v5e:2x2
jax: 0.10.0
libtpu: 0.0.40
codegen_flags: <defaults>
</compile_context>

<pallas_src>
import functools

import jax
import jax.numpy as jnp
from jax.experimental import pallas as pl
from jax.experimental.pallas import tpu as pltpu


def _round_up(x: int, m: int) -> int:
    return (x + m - 1) // m * m


# ----------------------------------------------------------------------------
# Pallas kernel
# ----------------------------------------------------------------------------
def _t2v_sine_kernel(tau_ref, w_ref, b_ref, o_ref, *, n_sin: int):
    # tau_ref : (TILE_ROWS, 1)   — scalar time values for this row tile
    # w_ref   : (1, F)           — [w | w0] fused weight row (resident)
    # b_ref   : (1, F)           — [b | b0] fused bias row   (resident)
    # o_ref   : (TILE_ROWS, F)   — lane-dense output tile
    tau = tau_ref[...]
    lin = tau * w_ref[...] + b_ref[...]                      # outer product + bias
    col = jax.lax.broadcasted_iota(jnp.int32, lin.shape, 1)
    # columns [0, n_sin) are the periodic branch, the last column stays linear
    o_ref[...] = jnp.where(col < n_sin, jnp.sin(lin), lin).astype(o_ref.dtype)


# ----------------------------------------------------------------------------
# Wrapper
# ----------------------------------------------------------------------------
def sine_activation_forward(tau, w, b, w0, b0, *, tile_rows: int | None = None):
    """Pallas forward of SineActivation.

    tau    : arbitrary-shaped float array of scalar time values
             (the PyTorch module requires in_features == 1).
    w, b   : (1, out_features - 1)
    w0, b0 : (1, 1)
    returns: tau.shape + (out_features,)
    """
    assert w.shape[0] == 1 and b.shape == w.shape
    assert w0.shape == (1, 1) and b0.shape == (1, 1)
    out_features = w.shape[1] + 1
    F = out_features
    dtype = tau.dtype

    # Fuse periodic + linear branches into single (1, F) rows (cast once to the
    # activation dtype so bf16 models move half the bytes).
    w_full = jnp.concatenate([w, w0], axis=1).astype(dtype)   # (1, F)
    b_full = jnp.concatenate([b, b0], axis=1).astype(dtype)   # (1, F)

    orig_shape = tau.shape
    n = 1
    for s in orig_shape:
        n *= s
    tau2 = tau.reshape(n, 1)

    # Tile sizing: cap each (double-buffered) output tile at ~4 MiB so the
    # working set fits v7x's 64 MiB VMEM; v5e/v6e simply see fewer, larger steps.
    if tile_rows is None:
        bytes_per_row = F * jnp.dtype(dtype).itemsize
        cap = max(8, ((4 * 1024 * 1024) // bytes_per_row) // 8 * 8)
        tile_rows = min(cap, _round_up(n, 8))

    n_pad = _round_up(n, tile_rows)
    if n_pad != n:
        tau2 = jnp.pad(tau2, ((0, n_pad - n), (0, 0)))

    grid = (n_pad // tile_rows,)
    kernel = functools.partial(_t2v_sine_kernel, n_sin=F - 1)

    out = pl.pallas_call(
        kernel,
        out_shape=jax.ShapeDtypeStruct((n_pad, F), dtype),
        grid_spec=pltpu.PrefetchScalarGridSpec(
            num_scalar_prefetch=0,
            grid=grid,
            in_specs=[
                pl.BlockSpec((tile_rows, 1), lambda i: (i, 0)),   # tau row tile
                pl.BlockSpec((1, F), lambda i: (0, 0)),           # resident weights
                pl.BlockSpec((1, F), lambda i: (0, 0)),           # resident biases
            ],
            out_specs=pl.BlockSpec((tile_rows, F), lambda i: (i, 0)),
        ),
        compiler_params=pltpu.CompilerParams(
            dimension_semantics=("parallel",),       # shard row tiles across v7x's 2 TCs
            vmem_limit_bytes=32 * 1024 * 1024,
        ),
    )(tau2, w_full, b_full)

    return out[:n].reshape(*orig_shape, F)


# ----------------------------------------------------------------------------
# Main
# ----------------------------------------------------------------------------
if __name__ == "__main__":
    in_features = 1            # required by the module's matmul (see header note)
    out_features = 128         # multiple of 128 -> lane-dense, unmasked stores
    batch, seq = 2, 8

    key = jax.random.PRNGKey(0)
    k_tau, k_w0, k_b0, k_w, k_b = jax.random.split(key, 5)
    tau = jax.random.normal(k_tau, (batch, seq), dtype=jnp.float32)
    w0 = jax.random.normal(k_w0, (in_features, 1), dtype=jnp.float32)
    b0 = jax.random.normal(k_b0, (in_features, 1), dtype=jnp.float32)
    w = jax.random.normal(k_w, (in_features, out_features - 1), dtype=jnp.float32)
    b = jax.random.normal(k_b, (in_features, out_features - 1), dtype=jnp.float32)

    out = sine_activation_forward(tau, w, b, w0, b0)
    out = jax.block_until_ready(out)

    # Pure-JAX reference mirroring the PyTorch t2v().
    tau_e = tau[..., None]                                # (B, S, 1)
    v1 = jnp.sin(jnp.matmul(tau_e, w) + b)                # (B, S, F-1)
    v2 = jnp.matmul(tau_e, w0) + b0                       # (B, S, 1)
    ref = jnp.concatenate([v1, v2], axis=-1)              # (B, S, F)

    assert out.shape == (batch, seq, out_features)
    assert jnp.allclose(out, ref, atol=1e-5, rtol=1e-5), float(
        jnp.max(jnp.abs(out - ref))
    )

    print("KERNEL_OK")
</pallas_src>

<mosaic_0001>
module attributes {stable_mosaic.version = 11 : i64} {
  func.func @_t2v_sine_kernel(%arg0: i32, %arg1: memref<16x1xf32, #tpu.memory_space<vmem>>, %arg2: memref<1x128xf32, #tpu.memory_space<vmem>>, %arg3: memref<1x128xf32, #tpu.memory_space<vmem>>, %arg4: memref<16x128xf32, #tpu.memory_space<vmem>>) attributes {dimension_semantics = [#tpu.dimension_semantics<parallel>], iteration_bounds = array<i64: 1>, scalar_prefetch = 0 : i64, scratch_operands = 0 : i64, tpu.core_type = #tpu.core_type<tc>, window_params = [{transform_indices = @transform_0, window_bounds = array<i64: 16, 1>}, {pipeline_mode = #tpu.pipeline_mode<synchronous>, transform_indices = @transform_1, window_bounds = array<i64: 1, 128>}, {pipeline_mode = #tpu.pipeline_mode<synchronous>, transform_indices = @transform_2, window_bounds = array<i64: 1, 128>}, {transform_indices = @transform_3, window_bounds = array<i64: 16, 128>}]} {
    %c0 = arith.constant 0 : index
    %c0_0 = arith.constant 0 : index
    %0 = vector.load %arg1[%c0, %c0_0] : memref<16x1xf32, #tpu.memory_space<vmem>>, vector<16x1xf32>
    %c0_1 = arith.constant 0 : index
    %c0_2 = arith.constant 0 : index
    %1 = vector.load %arg2[%c0_1, %c0_2] : memref<1x128xf32, #tpu.memory_space<vmem>>, vector<1x128xf32>
    %2 = vector.broadcast %0 : vector<16x1xf32> to vector<16x128xf32>
    %3 = vector.broadcast %1 : vector<1x128xf32> to vector<16x128xf32>
    %4 = arith.mulf %2, %3 : vector<16x128xf32>
    %c0_3 = arith.constant 0 : index
    %c0_4 = arith.constant 0 : index
    %5 = vector.load %arg3[%c0_3, %c0_4] : memref<1x128xf32, #tpu.memory_space<vmem>>, vector<1x128xf32>
    %6 = vector.broadcast %5 : vector<1x128xf32> to vector<16x128xf32>
    %7 = arith.addf %4, %6 : vector<16x128xf32>
    %8 = tpu.iota {dimensions = array<i32: 1>} : vector<16x128xi32>
    %c127_i32 = arith.constant 127 : i32
    %9 = vector.broadcast %c127_i32 : i32 to vector<16x128xi32>
    %10 = arith.cmpi slt, %8, %9 : vector<16x128xi32>
    %11 = math.sin %7 : vector<16x128xf32>
    %12 = arith.select %10, %11, %7 : vector<16x128xi1>, vector<16x128xf32>
    %c0_5 = arith.constant 0 : index
    %c0_6 = arith.constant 0 : index
    %13 = vector.load %arg4[%c0_5, %c0_6] : memref<16x128xf32, #tpu.memory_space<vmem>>, vector<16x128xf32>
    tpu.vector_store %arg4[%c0_5, %c0_6], %12 {strides = array<i32>} : memref<16x128xf32, #tpu.memory_space<vmem>>, vector<16x128xf32>,
    return
  }
  func.func @transform_0(%arg0: i32) -> (i32, i32) {
    %c0_i32 = arith.constant 0 : i32
    %c0_i32_0 = arith.constant 0 : i32
    return %arg0, %c0_i32 : i32, i32
  }
  func.func @transform_1(%arg0: i32) -> (i32, i32) {
    %c0_i32 = arith.constant 0 : i32
    %c0_i32_0 = arith.constant 0 : i32
    %c0_i32_1 = arith.constant 0 : i32
    return %c0_i32, %c0_i32_0 : i32, i32
  }
  func.func @transform_2(%arg0: i32) -> (i32, i32) {
    %c0_i32 = arith.constant 0 : i32
    %c0_i32_0 = arith.constant 0 : i32
    %c0_i32_1 = arith.constant 0 : i32
    return %c0_i32, %c0_i32_0 : i32, i32
  }
  func.func @transform_3(%arg0: i32) -> (i32, i32) {
    %c0_i32 = arith.constant 0 : i32
    %c0_i32_0 = arith.constant 0 : i32
    return %arg0, %c0_i32 : i32, i32
  }
}

</mosaic_0001>

<llo_original>
// kernel: tpu_custom_call.1
$region0: #{tpu_custom_call.1}
  #allocation0 [shape = 'u32[]', space=smem, size = 0x4, offset = 0x4, fixed_abs, tag = 'smem constant byte address 0x4 - core index']
  #allocation1 [shape = 'u32[72,128]{1,0:T(1,128)}', space=vmem, size = 0x9000, scoped, tag = 'internal scratch']
  %s0 = inlined_call_operand.vmem [shape: f32[16,1], index: 0, kind: input, shape index: {}]
  %s1 = inlined_call_operand.vmem [shape: f32[1,128], index: 1, kind: input, shape index: {}]
  %s2 = inlined_call_operand.vmem [shape: f32[1,128], index: 2, kind: input, shape index: {}]
  %s3 = inlined_call_operand.hbm [shape: f32[16,128], index: 3, kind: output, shape index: {}]
  %s4 = sld [smem:[#allocation0]]
  $region22: #{tpu_custom_call.1} parent=0
    _
  %s6 = ssub.s32 1, %s4
  %s7 = scalar_select 0, %s6, %s4
  $region1: #{tpu_custom_call.1} parent=0
    #allocation2 [shape = 'u8[8192]{0}', space=vmem, size = 0x2000, scoped, tag = 'output window, operand 0, single buffered']
    #allocation3 [shape = 's32[1]{0}', space=sflag, size = 0x4, scoped, tag = 'scoped memory for tpu_custom_call.1']
    %8 = vsyncpa [#allocation3], 0
    // Predicated region
    $region2: #{tpu_custom_call.1} parent=1 // pred_check
      _
    $region3: #{tpu_custom_call.1} parent=1 // pred_check_branch
      %10 = sbr.rel (0) target = $region5
    $region4: #{tpu_custom_call.1} parent=1 // pred_region
      _
    $region5: #{tpu_custom_call.1} parent=1 // pred_fallthru
      _
    // Predicated region
    $region6: #{tpu_custom_call.1} parent=1 // pred_check
      _
    $region7: #{tpu_custom_call.1} parent=1 // pred_check_branch
      %12 = sbr.rel (0) target = $region9
    $region8: #{tpu_custom_call.1} parent=1 // pred_region
      _
    $region9: #{tpu_custom_call.1} parent=1 // pred_fallthru
      _
    // Predicated region
    $region10: #{tpu_custom_call.1} parent=1 // pred_check
      _
    $region11: #{tpu_custom_call.1} parent=1 // pred_check_branch
      %14 = sbr.rel (0) target = $region13
    $region12: #{tpu_custom_call.1} parent=1 // pred_region
      _
    $region13: #{tpu_custom_call.1} parent=1 // pred_fallthru
      _
    %v15 = vld [vmem:[%s0] sm:$0xff]
    %v16 = vld [vmem:[%s0 + $0x8] sm:$0xff]
    %v17 = vld [vmem:[%s1] sm:$0x1]
    %19 = vset.pattern.permute.xlu0 0
    %20 = vperm.xlu0 %19, %v15
    %v21 = vpop.permute.xlu0 %20
    %24 = vset.pattern.permute.xlu0 0
    %25 = vperm.xlu0 %24, %v16
    %v26 = vpop.permute.xlu0 %25
    %v29 = vperm.slane %v17, 0
    %v31 = vmul.f32 %v21, %v29
    %v32 = vmul.f32 %v26, %v29
    %v33 = vld [vmem:[%s2] sm:$0x1]
    %v35 = vperm.slane %v33, 0
    %v37 = vadd.f32 %v31, %v35
    %v38 = vadd.f32 %v32, %v35
    %v39 = vlaneseq
    %v40 = vand.u32 %v39, 127
    %vm41 = vcmp.lt.s32.totalorder %v40, 127
    %v42 = vand.u32 2147483647, %v37
    %vm43 = vcmp.le.f32.partialorder %v42, 0.7853982
    %vm44 = vcmp.lt.s32.totalorder %v37, 0
    %v45 = vand.u32 %v37, 2139095040
    %v46 = vshrl.u32 %v45, 23
    %v47 = vsub.s32 %v46, 127
    %v48 = vand.u32 2147483647, %v37
    %v49 = vand.u32 %v48, 8388607
    %v50 = vor.u32 %v49, 8388608
    %v51 = vsub.s32 0, %v50
    %v52 = vadd.s32 %v47, 1
    %vm53 = vcmp.gt.s32.totalorder %v52, 0
    %v54 = vsel %vm53, %v52, 0
    %v55 = vshrl.u32 %v54, 5
    %v56 = vand.u32 %v54, 31
    %v57 = vsub.s32 32, %v56
    %v58 = vshrl.u32 683565275, %v57
    %v59 = vshll.u32 683565275, %v56
    %v60 = vshrl.u32 2475754826, %v57
    %v61 = vor.u32 %v59, %v60
    %v62 = vshll.u32 2475754826, %v56
    %v63 = vshrl.u32 2131351028, %v57
    %v64 = vor.u32 %v62, %v63
    %v65 = vshll.u32 2131351028, %v56
    %v66 = vshrl.u32 2102212464, %v57
    %v67 = vor.u32 %v65, %v66
    %v68 = vshll.u32 2102212464, %v56
    %v69 = vshrl.u32 920167782, %v57
    %v70 = vor.u32 %v68, %v69
    %v71 = vshll.u32 920167782, %v56
    %v72 = vshrl.u32 1326507024, %v57
    %v73 = vor.u32 %v71, %v72
    %vm74 = vcmp.lt.s32.totalorder %v55, 1
    %vm75 = vcmp.lt.s32.totalorder %v55, 2
    %vm76 = vcmp.lt.s32.totalorder %v55, 3
    %vm77 = vcmp.lt.s32.totalorder %v55, 4
    %v78 = vsel %vm74, %v58, %v61
    %v79 = vsel %vm77, %v67, 2102212464
    %v80 = vsel %vm76, %v64, %v79
    %v81 = vsel %vm75, %v78, %v80
    %v82 = vsel %vm74, %v61, %v64
    %v83 = vsel %vm77, %v70, 920167782
    %v84 = vsel %vm76, %v67, %v83
    %v85 = vsel %vm75, %v82, %v84
    %v86 = vsel %vm74, %v64, %v67
    %v87 = vsel %vm77, %v73, 1326507024
    %v88 = vsel %vm76, %v70, %v87
    %v89 = vsel %vm75, %v86, %v88
    %v90 = vshll.u32 %v50, 8
    %v91 = vand.u32 %v90, 65535
    %v92 = vshrl.u32 %v90, 16
    %v93 = vand.u32 %v89, 65535
    %v94 = vshrl.u32 %v89, 16
    %v95 = vmul.u32 %v91, %v93
    %v96 = vmul.u32 %v91, %v94
    %v97 = vmul.u32 %v92, %v93
    %v98 = vmul.u32 %v92, %v94
    %v99 = vshll.u32 %v96, 16
    %v100 = vshrl.u32 %v96, 16
    %v101 = vshll.u32 %v97, 16
    %v102 = vshrl.u32 %v97, 16
    %vm103 = vc.u32 %v95, %v99
    %v104 = vsel %vm103, 1, 0
    %v105 = vadd.s32 %v95, %v99
    %v106 = vadd.s32 %v98, %v104
    %vm107 = vc.u32 %v105, %v101
    %v108 = vsel %vm107, 1, 0
    %v109 = vadd.s32 %v105, %v101
    %v110 = vadd.s32 %v106, %v108
    %v111 = vadd.s32 %v110, %v100
    %v112 = vadd.s32 %v111, %v102
    %v113 = vand.u32 %v90, 65535
    %v114 = vshrl.u32 %v90, 16
    %v115 = vand.u32 %v85, 65535
    %v116 = vshrl.u32 %v85, 16
    %v117 = vmul.u32 %v113, %v115
    %v118 = vmul.u32 %v113, %v116
    %v119 = vmul.u32 %v114, %v115
    %v120 = vmul.u32 %v114, %v116
    %v121 = vshll.u32 %v118, 16
    %v122 = vshrl.u32 %v118, 16
    %v123 = vshll.u32 %v119, 16
    %v124 = vshrl.u32 %v119, 16
    %vm125 = vc.u32 %v117, %v121
    %v126 = vsel %vm125, 1, 0
    %v127 = vadd.s32 %v117, %v121
    %v128 = vadd.s32 %v120, %v126
    %vm129 = vc.u32 %v127, %v123
    %v130 = vsel %vm129, 1, 0
    %v131 = vadd.s32 %v127, %v123
    %v132 = vadd.s32 %v128, %v130
    %v133 = vadd.s32 %v132, %v122
    %v134 = vadd.s32 %v133, %v124
    %v135 = vmul.u32 %v90, %v81
    %v136 = vadd.s32 %v112, %v131
    %vm137 = vc.u32 %v112, %v131
    %v138 = vadd.s32 %v134, 1
    %v139 = vsel %vm137, %v138, %v134
    %v140 = vadd.s32 %v135, %v139
    %v141 = vadd.s32 %v140, 536870912
    %v142 = vshrl.u32 %v141, 30
    %v143 = vshll.u32 %v142, 30
    %v144 = vsub.s32 %v140, %v143
    %vm145 = vcmp.lt.s32.totalorder %v144, 0
    %v146 = vsub.s32 0, %v144
    %v147 = vsel %vm145, %v146, %v144
    %v148 = vclz %v147
    %v149 = vsub.s32 %v148, 2
    %vm150 = vcmp.gt.s32.totalorder 0, %v149
    %v151 = vsel %vm150, 0, %v149
    %v152 = vsub.s32 32, %v151
    %v153 = vshll.u32 %v144, %v151
    %v154 = vshrl.u32 %v136, %v152
    %v155 = vor.u32 %v153, %v154
    %v156 = vsub.s32 4294967266, %v151
    %v157 = vadd.s32 %v156, 127
    %v158 = vshll.u32 %v157, 23
    %v159 = vor.u32 4788187, %v158
    %v160 = vand.u32 2147483647, %v159
    %v162 = vcvt.s32.f32 %v155
    %v163 = vmul.f32 %v162, %v160
    %v164 = vxor.u32 %v163, 2147483648
    %v165 = vsel %vm44, %v164, %v163
    %v166 = vsub.s32 4, %v142
    %v167 = vsel %vm44, %v166, %v142
    %v168 = vsel %vm43, %v37, %v165
    %v169 = vsel %vm43, 0, %v167
    %v170 = vmul.f32 %v168, %v168
    %v171 = vmul.f32 %v170, -0.001358992
    %v172 = vadd.f32 %v171, 0.041655596
    %v173 = vmul.f32 %v170, %v172
    %v174 = vadd.f32 %v173, -0.4999988
    %v175 = vmul.f32 %v170, %v174
    %v176 = vadd.f32 1.0, %v175
    %v177 = vmul.f32 %v168, %v168
    %v178 = vmul.f32 %v177, -0.00019511016
    %v179 = vadd.f32 %v178, 0.008332121
    %v180 = vmul.f32 %v177, %v179
    %v181 = vadd.f32 %v180, -0.16666654
    %v182 = vmul.f32 %v177, %v181
    %v183 = vadd.f32 %v182, 1.0
    %v184 = vmul.f32 %v183, %v168
    %vm185 = vweird.f32 %v37
    %v186 = vadd.s32 %v169, 3
    %v187 = vand.u32 %v186, 3
    %vm188 = vcmp.lt.s32.totalorder %v187, 2
    %vm189 = vcmp.eq.s32.totalorder %v187, 0
    %v190 = vxor.u32 %v184, 2147483648
    %v191 = vsel %vm189, %v176, %v190
    %vm192 = vcmp.eq.s32.totalorder %v187, 2
    %v193 = vxor.u32 %v176, 2147483648
    %v194 = vsel %vm192, %v193, %v184
    %v195 = vsel %vm188, %v191, %v194
    %v196 = vsel %vm185, nan, %v195
    %v197 = vand.u32 2147483647, %v38
    %vm198 = vcmp.le.f32.partialorder %v197, 0.7853982
    %vm199 = vcmp.lt.s32.totalorder %v38, 0
    %v200 = vand.u32 %v38, 2139095040
    %v201 = vshrl.u32 %v200, 23
    %v202 = vsub.s32 %v201, 127
    %v203 = vand.u32 2147483647, %v38
    %v204 = vand.u32 %v203, 8388607
    %v205 = vor.u32 %v204, 8388608
    %v206 = vsub.s32 0, %v205
    %v207 = vadd.s32 %v202, 1
    %vm208 = vcmp.gt.s32.totalorder %v207, 0
    %v209 = vsel %vm208, %v207, 0
    %v210 = vshrl.u32 %v209, 5
    %v211 = vand.u32 %v209, 31
    %v212 = vsub.s32 32, %v211
    %v213 = vshrl.u32 683565275, %v212
    %v214 = vshll.u32 683565275, %v211
    %v215 = vshrl.u32 2475754826, %v212
    %v216 = vor.u32 %v214, %v215
    %v217 = vshll.u32 2475754826, %v211
    %v218 = vshrl.u32 2131351028, %v212
    %v219 = vor.u32 %v217, %v218
    %v220 = vshll.u32 2131351028, %v211
    %v221 = vshrl.u32 2102212464, %v212
    %v222 = vor.u32 %v220, %v221
    %v223 = vshll.u32 2102212464, %v211
    %v224 = vshrl.u32 920167782, %v212
    %v225 = vor.u32 %v223, %v224
    %v226 = vshll.u32 920167782, %v211
    %v227 = vshrl.u32 1326507024, %v212
    %v228 = vor.u32 %v226, %v227
    %vm229 = vcmp.lt.s32.totalorder %v210, 1
    %vm230 = vcmp.lt.s32.totalorder %v210, 2
    %vm231 = vcmp.lt.s32.totalorder %v210, 3
    %vm232 = vcmp.lt.s32.totalorder %v210, 4
    %v233 = vsel %vm229, %v213, %v216
    %v234 = vsel %vm232, %v222, 2102212464
    %v235 = vsel %vm231, %v219, %v234
    %v236 = vsel %vm230, %v233, %v235
    %v237 = vsel %vm229, %v216, %v219
    %v238 = vsel %vm232, %v225, 920167782
    %v239 = vsel %vm231, %v222, %v238
    %v240 = vsel %vm230, %v237, %v239
    %v241 = vsel %vm229, %v219, %v222
    %v242 = vsel %vm232, %v228, 1326507024
    %v243 = vsel %vm231, %v225, %v242
    %v244 = vsel %vm230, %v241, %v243
    %v245 = vshll.u32 %v205, 8
    %v246 = vand.u32 %v245, 65535
    %v247 = vshrl.u32 %v245, 16
    %v248 = vand.u32 %v244, 65535
    %v249 = vshrl.u32 %v244, 16
    %v250 = vmul.u32 %v246, %v248
    %v251 = vmul.u32 %v246, %v249
    %v252 = vmul.u32 %v247, %v248
    %v253 = vmul.u32 %v247, %v249
    %v254 = vshll.u32 %v251, 16
    %v255 = vshrl.u32 %v251, 16
    %v256 = vshll.u32 %v252, 16
    %v257 = vshrl.u32 %v252, 16
    %vm258 = vc.u32 %v250, %v254
    %v259 = vsel %vm258, 1, 0
    %v260 = vadd.s32 %v250, %v254
    %v261 = vadd.s32 %v253, %v259
    %vm262 = vc.u32 %v260, %v256
    %v263 = vsel %vm262, 1, 0
    %v264 = vadd.s32 %v260, %v256
    %v265 = vadd.s32 %v261, %v263
    %v266 = vadd.s32 %v265, %v255
    %v267 = vadd.s32 %v266, %v257
    %v268 = vand.u32 %v245, 65535
    %v269 = vshrl.u32 %v245, 16
    %v270 = vand.u32 %v240, 65535
    %v271 = vshrl.u32 %v240, 16
    %v272 = vmul.u32 %v268, %v270
    %v273 = vmul.u32 %v268, %v271
    %v274 = vmul.u32 %v269, %v270
    %v275 = vmul.u32 %v269, %v271
    %v276 = vshll.u32 %v273, 16
    %v277 = vshrl.u32 %v273, 16
    %v278 = vshll.u32 %v274, 16
    %v279 = vshrl.u32 %v274, 16
    %vm280 = vc.u32 %v272, %v276
    %v281 = vsel %vm280, 1, 0
    %v282 = vadd.s32 %v272, %v276
    %v283 = vadd.s32 %v275, %v281
    %vm284 = vc.u32 %v282, %v278
    %v285 = vsel %vm284, 1, 0
    %v286 = vadd.s32 %v282, %v278
    %v287 = vadd.s32 %v283, %v285
    %v288 = vadd.s32 %v287, %v277
    %v289 = vadd.s32 %v288, %v279
    %v290 = vmul.u32 %v245, %v236
    %v291 = vadd.s32 %v267, %v286
    %vm292 = vc.u32 %v267, %v286
    %v293 = vadd.s32 %v289, 1
    %v294 = vsel %vm292, %v293, %v289
    %v295 = vadd.s32 %v290, %v294
    %v296 = vadd.s32 %v295, 536870912
    %v297 = vshrl.u32 %v296, 30
    %v298 = vshll.u32 %v297, 30
    %v299 = vsub.s32 %v295, %v298
    %vm300 = vcmp.lt.s32.totalorder %v299, 0
    %v301 = vsub.s32 0, %v299
    %v302 = vsel %vm300, %v301, %v299
    %v303 = vclz %v302
    %v304 = vsub.s32 %v303, 2
    %vm305 = vcmp.gt.s32.totalorder 0, %v304
    %v306 = vsel %vm305, 0, %v304
    %v307 = vsub.s32 32, %v306
    %v308 = vshll.u32 %v299, %v306
    %v309 = vshrl.u32 %v291, %v307
    %v310 = vor.u32 %v308, %v309
    %v311 = vsub.s32 4294967266, %v306
    %v312 = vadd.s32 %v311, 127
    %v313 = vshll.u32 %v312, 23
    %v314 = vor.u32 4788187, %v313
    %v315 = vand.u32 2147483647, %v314
    %v317 = vcvt.s32.f32 %v310
    %v318 = vmul.f32 %v317, %v315
    %v319 = vxor.u32 %v318, 2147483648
    %v320 = vsel %vm199, %v319, %v318
    %v321 = vsub.s32 4, %v297
    %v322 = vsel %vm199, %v321, %v297
    %v323 = vsel %vm198, %v38, %v320
    %v324 = vsel %vm198, 0, %v322
    %v325 = vmul.f32 %v323, %v323
    %v326 = vmul.f32 %v325, -0.001358992
    %v327 = vadd.f32 %v326, 0.041655596
    %v328 = vmul.f32 %v325, %v327
    %v329 = vadd.f32 %v328, -0.4999988
    %v330 = vmul.f32 %v325, %v329
    %v331 = vadd.f32 1.0, %v330
    %v332 = vmul.f32 %v323, %v323
    %v333 = vmul.f32 %v332, -0.00019511016
    %v334 = vadd.f32 %v333, 0.008332121
    %v335 = vmul.f32 %v332, %v334
    %v336 = vadd.f32 %v335, -0.16666654
    %v337 = vmul.f32 %v332, %v336
    %v338 = vadd.f32 %v337, 1.0
    %v339 = vmul.f32 %v338, %v323
    %vm340 = vweird.f32 %v38
    %v341 = vadd.s32 %v324, 3
    %v342 = vand.u32 %v341, 3
    %vm343 = vcmp.lt.s32.totalorder %v342, 2
    %vm344 = vcmp.eq.s32.totalorder %v342, 0
    %v345 = vxor.u32 %v339, 2147483648
    %v346 = vsel %vm344, %v331, %v345
    %vm347 = vcmp.eq.s32.totalorder %v342, 2
    %v348 = vxor.u32 %v331, 2147483648
    %v349 = vsel %vm347, %v348, %v339
    %v350 = vsel %vm343, %v346, %v349
    %v351 = vsel %vm340, nan, %v350
    %v352 = vsel %vm41, %v196, %v37
    %v353 = vsel %vm41, %v351, %v38
    %354 = vst [vmem:[#allocation2] sm:$0xff] %v352
    %355 = vst [vmem:[#allocation2 + $0x8] sm:$0xff] %v353
    // Predicated region
    $region14: #{tpu_custom_call.1} parent=1 // pred_check
      _
    $region15: #{tpu_custom_call.1} parent=1 // pred_check_branch
      %357 = sbr.rel (0) target = $region17
    $region16: #{tpu_custom_call.1} parent=1 // pred_region
      %359 = vsyncadd [#allocation3], 0
      %s360 = sshll.u32 [#allocation2], 4
      %s361 = int_to_ptr.vmem [resolvable:$true] %s360
      %s362 = sshll.u32 %s3, 4
      %s363 = int_to_ptr.hbm [resolvable:$true] %s362
      %368 = dma.vmem_to_hbm [thread:$0]  %s361, 256, %s363, [#allocation3], 128, 128, 8
    $region17: #{tpu_custom_call.1} parent=1 // pred_fallthru
      _
    // Predicated region
    $region18: #{tpu_custom_call.1} parent=1 // pred_check
      _
    $region19: #{tpu_custom_call.1} parent=1 // pred_check_branch
      %370 = sbr.rel (0) target = $region21
    $region20: #{tpu_custom_call.1} parent=1 // pred_region
      %372 = dma.done [#allocation3], 256
    $region21: #{tpu_custom_call.1} parent=1 // pred_fallthru
      _
    %373 = vsyncpa [#allocation3], 1

</llo_original>
